<compile_context>
chip_gen: v7x
topology: tpu7x:2x2x1
jax: 0.10.0
libtpu: 0.0.40
codegen_flags: <defaults>
</compile_context>

<pallas_src>
import functools

import jax
import jax.numpy as jnp
from jax.experimental import pallas as pl
from jax.experimental.pallas import tpu as pltpu


_VMEM_LIMIT = 40 * 1024 * 1024   # scoped VMEM: safe on v5e/v6e (128 MiB phys) and v7x (64 MiB phys)
_TILE_BUDGET = 20 * 1024 * 1024  # target bytes for the double-buffered lane-scaled tiles
_MAX_TP = 64 * 1024              # lane cap per tile (keeps blocks sane for tiny channel counts)


def _round_up(x, m):
    return ((x + m - 1) // m) * m


def _cdiv(a, b):
    return -(-a // b)


def _pick_tp(bytes_per_lane, p, cap):
    """Lane-dense tile width: multiple of 128, within budget / cap / padded extent."""
    tp = _TILE_BUDGET // max(1, bytes_per_lane)
    tp = max(128, min(cap, (tp // 128) * 128))
    return min(tp, _round_up(p, 128))


def _cparams(dimension_semantics):
    return pltpu.CompilerParams(dimension_semantics=dimension_semantics,
                                vmem_limit_bytes=_VMEM_LIMIT)


# ----------------------------- Kernels -------------------------------------
def _stats_kernel(x_ref, w_ref, sum_ref, sq_ref, *, tp, gps, p_total, need_mask):
    """Partial per-channel sum / sumsq of u = W @ x for one (sample, split)."""
    p = pl.program_id(2)

    @pl.when(p == 0)
    def _init():
        sum_ref[...] = jnp.zeros_like(sum_ref)
        sq_ref[...] = jnp.zeros_like(sq_ref)

    x = x_ref[...]
    if need_mask:
        # Zero out lanes past the true spatial extent (ragged last tile and/or
        # the clamped duplicate tile introduced by the 2-way reduction split).
        s = pl.program_id(1)
        col = (s * gps + p) * tp + jax.lax.broadcasted_iota(jnp.int32, (1, tp), 1)
        x = jnp.where(col < p_total, x, jnp.zeros_like(x))

    u = jnp.dot(w_ref[...], x, preferred_element_type=jnp.float32)
    sum_ref[...] += jnp.sum(u, axis=1, keepdims=True)
    sq_ref[...] += jnp.sum(u * u, axis=1, keepdims=True)


def _conv_stats_kernel(x_ref, w_ref, u_ref, sum_ref, sq_ref, *, tp, p_total, need_mask):
    """u = W @ x written to HBM + per-sample partial stats (store-u strategy)."""
    p = pl.program_id(1)

    @pl.when(p == 0)
    def _init():
        sum_ref[...] = jnp.zeros_like(sum_ref)
        sq_ref[...] = jnp.zeros_like(sq_ref)

    x = x_ref[...]
    if need_mask:
        col = p * tp + jax.lax.broadcasted_iota(jnp.int32, (1, tp), 1)
        x = jnp.where(col < p_total, x, jnp.zeros_like(x))

    u = jnp.dot(w_ref[...], x, preferred_element_type=jnp.float32)
    u_ref[...] = u.astype(u_ref.dtype)                     # OOB tail writes are clipped
    sum_ref[...] += jnp.sum(u, axis=1, keepdims=True)
    sq_ref[...] += jnp.sum(u * u, axis=1, keepdims=True)


def _conv_bn_act_kernel(x_ref, ws_ref, shift_ref, o_ref):
    """Fused (scale*W)@x + shift -> LeakyReLU (recompute strategy, pass 2)."""
    z = jnp.dot(ws_ref[...], x_ref[...], preferred_element_type=jnp.float32)
    z = z + shift_ref[...]
    o_ref[...] = jnp.where(z >= 0, z, 0.01 * z).astype(o_ref.dtype)


def _bn_act_kernel(u_ref, scale_ref, shift_ref, o_ref):
    """Elementwise scale*u + shift -> LeakyReLU (store-u strategy, pass 2)."""
    z = u_ref[...].astype(jnp.float32) * scale_ref[...] + shift_ref[...]
    o_ref[...] = jnp.where(z >= 0, z, 0.01 * z).astype(o_ref.dtype)


# ------------------------------ Glue ---------------------------------------
def _fold_scale_shift(sum_u, sum_u2, count, gamma, beta, eps):
    mean_u = sum_u / count
    var = sum_u2 / count - mean_u * mean_u            # biased batch variance
    # TODO(synk): E[u^2]-E[u]^2 can cancel catastrophically for very large
    # counts / means; switch to centered/Welford partials if this feeds training.
    var = jnp.maximum(var, 0.0)
    inv_std = jax.lax.rsqrt(var + jnp.float32(eps))
    scale = gamma.astype(jnp.float32) * inv_std
    # The conv bias is absorbed (and removed) by the training-mode batch mean.
    shift = beta.astype(jnp.float32) - mean_u * scale
    return scale, shift


# ------------------------------ Wrapper ------------------------------------
def output_block_forward(x_nchw, w_conv, b_conv, gamma, beta, eps=1e-5,
                         max_lanes_per_tile=None):
    """x_nchw: (N, Cin, H, W). w_conv: (Cout, Cin, 1, 1). Returns (N, Cout, H, W)."""
    N, Cin, H, W = x_nchw.shape
    Cout = w_conv.shape[0]
    P = H * W
    out_dtype = x_nchw.dtype
    x_b = jnp.dtype(x_nchw.dtype).itemsize
    o_b = jnp.dtype(out_dtype).itemsize

    cap = _MAX_TP if max_lanes_per_tile is None else max(
        128, (int(max_lanes_per_tile) // 128) * 128)

    x3 = x_nchw.reshape(N, Cin, P)                     # free: merges trailing dims
    w2 = w_conv.reshape(Cout, Cin).astype(x_nchw.dtype)
    del b_conv                                         # cancels against batch mean
    count = jnp.float32(N * P)

    # HBM words/pixel: recompute = 2*Cin + Cout, store-u = Cin + 3*Cout.
    store_u = Cin > 2 * Cout

    if not store_u:
        # ---- pass 1: per-(sample, split) partial stats of u = W @ x --------
        tp1 = _pick_tp(2 * Cin * x_b, P, cap)
        gp_total = _cdiv(P, tp1)
        S = 2 if (gp_total >= 2 and N % 2 == 1) else 1   # v7x 2-TC split for odd / 1 batches
        gps = _cdiv(gp_total, S)
        need_mask = S * gps * tp1 > P

        if S * gps == gp_total:
            x_idx = lambda n, s, p: (n, 0, s * gps + p)
        else:  # clamp duplicate tail tiles (they are masked to zero in-kernel)
            x_idx = lambda n, s, p: (n, 0, jnp.minimum(s * gps + p, gp_total - 1))

        stats_sum, stats_sq = pl.pallas_call(
            functools.partial(_stats_kernel, tp=tp1, gps=gps, p_total=P,
                              need_mask=need_mask),
            out_shape=(jax.ShapeDtypeStruct((N, S, Cout, 1), jnp.float32),
                       jax.ShapeDtypeStruct((N, S, Cout, 1), jnp.float32)),
            grid=(N, S, gps),
            in_specs=[pl.BlockSpec((None, Cin, tp1), x_idx),
                      pl.BlockSpec((Cout, Cin), lambda n, s, p: (0, 0))],
            out_specs=(pl.BlockSpec((None, None, Cout, 1), lambda n, s, p: (n, s, 0, 0)),
                       pl.BlockSpec((None, None, Cout, 1), lambda n, s, p: (n, s, 0, 0))),
            compiler_params=_cparams(("parallel", "parallel", "arbitrary")),
        )(x3, w2)

        scale, shift = _fold_scale_shift(
            jnp.sum(stats_sum[..., 0], axis=(0, 1)),
            jnp.sum(stats_sq[..., 0], axis=(0, 1)),
            count, gamma, beta, eps)

        # ---- pass 2: fused (scale*W)@x + shift -> LeakyReLU -----------------
        w_scaled = (scale[:, None] * w2.astype(jnp.float32)).astype(x_nchw.dtype)
        shift_col = shift.reshape(Cout, 1)

        tp2 = _pick_tp(2 * (Cin * x_b + Cout * o_b), P, cap)
        gp2 = _cdiv(P, tp2)
        out3 = pl.pallas_call(
            _conv_bn_act_kernel,
            out_shape=jax.ShapeDtypeStruct((N, Cout, P), out_dtype),
            grid=(N, gp2),
            in_specs=[pl.BlockSpec((None, Cin, tp2), lambda n, p: (n, 0, p)),
                      pl.BlockSpec((Cout, Cin), lambda n, p: (0, 0)),
                      pl.BlockSpec((Cout, 1), lambda n, p: (0, 0))],
            out_specs=pl.BlockSpec((None, Cout, tp2), lambda n, p: (n, 0, p)),
            compiler_params=_cparams(("parallel", "parallel")),
        )(x3, w_scaled, shift_col)

    else:
        # ---- pass 1: u = W @ x stored to HBM + per-sample partial stats -----
        tp1 = _pick_tp(2 * (Cin * x_b + Cout * o_b), P, cap)
        gp1 = _cdiv(P, tp1)
        need_mask = gp1 * tp1 > P

        u3, stats_sum, stats_sq = pl.pallas_call(
            functools.partial(_conv_stats_kernel, tp=tp1, p_total=P,
                              need_mask=need_mask),
            out_shape=(jax.ShapeDtypeStruct((N, Cout, P), out_dtype),
                       jax.ShapeDtypeStruct((N, Cout, 1), jnp.float32),
                       jax.ShapeDtypeStruct((N, Cout, 1), jnp.float32)),
            grid=(N, gp1),
            in_specs=[pl.BlockSpec((None, Cin, tp1), lambda n, p: (n, 0, p)),
                      pl.BlockSpec((Cout, Cin), lambda n, p: (0, 0))],
            out_specs=(pl.BlockSpec((None, Cout, tp1), lambda n, p: (n, 0, p)),
                       pl.BlockSpec((None, Cout, 1), lambda n, p: (n, 0, 0)),
                       pl.BlockSpec((None, Cout, 1), lambda n, p: (n, 0, 0))),
            compiler_params=_cparams(("parallel", "arbitrary")),
        )(x3, w2)

        scale, shift = _fold_scale_shift(
            jnp.sum(stats_sum[..., 0], axis=0),
            jnp.sum(stats_sq[..., 0], axis=0),
            count, gamma, beta, eps)

        # ---- pass 2: elementwise scale*u + shift -> LeakyReLU ---------------
        tp2 = _pick_tp(4 * Cout * o_b, P, cap)
        gp2 = _cdiv(P, tp2)
        out3 = pl.pallas_call(
            _bn_act_kernel,
            out_shape=jax.ShapeDtypeStruct((N, Cout, P), out_dtype),
            grid=(N, gp2),
            in_specs=[pl.BlockSpec((None, Cout, tp2), lambda n, p: (n, 0, p)),
                      pl.BlockSpec((Cout, 1), lambda n, p: (0, 0)),
                      pl.BlockSpec((Cout, 1), lambda n, p: (0, 0))],
            out_specs=pl.BlockSpec((None, Cout, tp2), lambda n, p: (n, 0, p)),
            compiler_params=_cparams(("parallel", "parallel")),
        )(u3, scale.reshape(Cout, 1), shift.reshape(Cout, 1))

    return out3.reshape(N, Cout, H, W)


# ------------------------------ Reference ----------------------------------
def output_block_reference(x_nchw, w_conv, b_conv, gamma, beta, eps=1e-5):
    Cout, Cin = w_conv.shape[0], w_conv.shape[1]
    y = jnp.einsum("nchw,oc->nohw", x_nchw.astype(jnp.float32),
                   w_conv.reshape(Cout, Cin).astype(jnp.float32))
    y = y + b_conv.reshape(1, -1, 1, 1)
    mean = jnp.mean(y, axis=(0, 2, 3), keepdims=True)
    var = jnp.mean((y - mean) ** 2, axis=(0, 2, 3), keepdims=True)
    yhat = (y - mean) / jnp.sqrt(var + eps)
    z = gamma.reshape(1, -1, 1, 1) * yhat + beta.reshape(1, -1, 1, 1)
    return jnp.where(z >= 0, z, 0.01 * z)


if __name__ == "__main__":
    def run_case(seed, N, Cin, Cout, H, W, max_lanes=None):
        key = jax.random.fold_in(jax.random.PRNGKey(0), seed)
        k_x, k_w, k_b, k_g, k_be = jax.random.split(key, 5)
        x = jax.random.normal(k_x, (N, Cin, H, W), dtype=jnp.float32)
        w = jax.random.normal(k_w, (Cout, Cin, 1, 1), dtype=jnp.float32) * 0.1
        b = jax.random.normal(k_b, (Cout,), dtype=jnp.float32) * 0.1
        g = 1.0 + 0.1 * jax.random.normal(k_g, (Cout,), dtype=jnp.float32)
        be = 0.1 * jax.random.normal(k_be, (Cout,), dtype=jnp.float32)

        if max_lanes is None:
            fwd = jax.jit(output_block_forward)
        else:
            fwd = jax.jit(lambda *a: output_block_forward(*a, max_lanes_per_tile=max_lanes))
        out = jax.block_until_ready(fwd(x, w, b, g, be))
        ref = output_block_reference(x, w, b, g, be)
        assert out.shape == ref.shape
        assert jnp.allclose(out, ref, atol=1e-4, rtol=1e-4), \
            f"mismatch vs reference for case {(N, Cin, Cout, H, W, max_lanes)}"

    # 1) Cout >= Cin/2 -> recompute-conv path, lane-aligned spatial extent.
    run_case(1, 2, 4, 8, 16, 16)
    # 2) Cin > 2*Cout -> store-u path; ragged H*W=144 exercises in-kernel
    #    masking and clipped partial-block writes (no host pad / slice).
    run_case(2, 2, 32, 4, 12, 12)
    # 3) Recompute path, multi-tile reduction with the 2-way core split
    #    (clamped duplicate tail tile) and a ragged last tile (N=1).
    run_case(3, 1, 4, 8, 20, 15, max_lanes=128)
    # 4) Store-u path with multi-tile stats accumulation and a ragged tail.
    run_case(4, 2, 24, 4, 12, 12, max_lanes=128)

    print("KERNEL_OK")
</pallas_src>

<mosaic_0001>
module attributes {stable_mosaic.version = 11 : i64} {
  func.func @_stats_kernel(%arg0: i32, %arg1: i32, %arg2: i32, %arg3: memref<1x4x256xf32, #tpu.memory_space<vmem>>, %arg4: memref<8x4xf32, #tpu.memory_space<vmem>>, %arg5: memref<1x1x8x1xf32, #tpu.memory_space<vmem>>, %arg6: memref<1x1x8x1xf32, #tpu.memory_space<vmem>>) attributes {dimension_semantics = [#tpu.dimension_semantics<parallel>, #tpu.dimension_semantics<parallel>, #tpu.dimension_semantics<arbitrary>], iteration_bounds = array<i64: 2, 1, 1>, scalar_prefetch = 0 : i64, scratch_operands = 0 : i64, tpu.core_type = #tpu.core_type<tc>, window_params = [{transform_indices = @transform_0, window_bounds = array<i64: 1, 4, 256>}, {pipeline_mode = #tpu.pipeline_mode<synchronous>, transform_indices = @transform_1, window_bounds = array<i64: 8, 4>}, {transform_indices = @transform_2, window_bounds = array<i64: 1, 1, 8, 1>}, {transform_indices = @transform_3, window_bounds = array<i64: 1, 1, 8, 1>}]} {
    %c0_i32 = arith.constant 0 : i32
    %0 = arith.cmpi eq, %arg2, %c0_i32 : i32
    %1 = arith.extui %0 : i1 to i32
    %c0_i32_0 = arith.constant 0 : i32
    %2 = arith.cmpi ne, %1, %c0_i32_0 : i32
    scf.if %2 {
      %cst_23 = arith.constant 0.000000e+00 : f32
      %24 = vector.broadcast %cst_23 : f32 to vector<8x1xf32>
      %c0_24 = arith.constant 0 : index
      %c0_25 = arith.constant 0 : index
      %c0_26 = arith.constant 0 : index
      %c0_27 = arith.constant 0 : index
      %25 = vector.load %arg5[%c0_24, %c0_25, %c0_26, %c0_27] : memref<1x1x8x1xf32, #tpu.memory_space<vmem>>, vector<1x1x8x1xf32>
      %26 = vector.shape_cast %25 : vector<1x1x8x1xf32> to vector<8x1xf32>
      %27 = vector.shape_cast %24 : vector<8x1xf32> to vector<1x1x8x1xf32>
      tpu.vector_store %arg5[%c0_24, %c0_25, %c0_26, %c0_27], %27 {strides = array<i32>} : memref<1x1x8x1xf32, #tpu.memory_space<vmem>>, vector<1x1x8x1xf32>,
      %cst_28 = arith.constant 0.000000e+00 : f32
      %28 = vector.broadcast %cst_28 : f32 to vector<8x1xf32>
      %c0_29 = arith.constant 0 : index
      %c0_30 = arith.constant 0 : index
      %c0_31 = arith.constant 0 : index
      %c0_32 = arith.constant 0 : index
      %29 = vector.load %arg6[%c0_29, %c0_30, %c0_31, %c0_32] : memref<1x1x8x1xf32, #tpu.memory_space<vmem>>, vector<1x1x8x1xf32>
      %30 = vector.shape_cast %29 : vector<1x1x8x1xf32> to vector<8x1xf32>
      %31 = vector.shape_cast %28 : vector<8x1xf32> to vector<1x1x8x1xf32>
      tpu.vector_store %arg6[%c0_29, %c0_30, %c0_31, %c0_32], %31 {strides = array<i32>} : memref<1x1x8x1xf32, #tpu.memory_space<vmem>>, vector<1x1x8x1xf32>,
    } else {
    }
    %c0 = arith.constant 0 : index
    %c0_1 = arith.constant 0 : index
    %c0_2 = arith.constant 0 : index
    %3 = vector.load %arg3[%c0, %c0_1, %c0_2] : memref<1x4x256xf32, #tpu.memory_space<vmem>>, vector<1x4x256xf32>
    %4 = vector.shape_cast %3 : vector<1x4x256xf32> to vector<4x256xf32>
    %c0_3 = arith.constant 0 : index
    %c0_4 = arith.constant 0 : index
    %5 = vector.load %arg4[%c0_3, %c0_4] : memref<8x4xf32, #tpu.memory_space<vmem>>, vector<8x4xf32>
    %cst = arith.constant dense<0.000000e+00> : vector<8x256xf32>
    %6 = tpu.matmul %5, %4, %cst {dimension_numbers = #tpu.dot_dimension_numbers<[1], [0], [0], [1], [0, 0, 1, 1], [], []>} : vector<8x4xf32>, vector<4x256xf32>, vector<8x256xf32> -> vector<8x256xf32>
    %c0_5 = arith.constant 0 : index
    %c0_6 = arith.constant 0 : index
    %c0_7 = arith.constant 0 : index
    %c0_8 = arith.constant 0 : index
    %7 = vector.load %arg5[%c0_5, %c0_6, %c0_7, %c0_8] : memref<1x1x8x1xf32, #tpu.memory_space<vmem>>, vector<1x1x8x1xf32>
    %8 = vector.shape_cast %7 : vector<1x1x8x1xf32> to vector<8x1xf32>
    %cst_9 = arith.constant dense<0.000000e+00> : vector<8xf32>
    %9 = vector.multi_reduction <add>, %6, %cst_9 [1] : vector<8x256xf32> to vector<8xf32>
    %10 = vector.shape_cast %9 : vector<8xf32> to vector<8x1xf32>
    %11 = arith.addf %8, %10 : vector<8x1xf32>
    %c0_10 = arith.constant 0 : index
    %c0_11 = arith.constant 0 : index
    %c0_12 = arith.constant 0 : index
    %c0_13 = arith.constant 0 : index
    %12 = vector.load %arg5[%c0_10, %c0_11, %c0_12, %c0_13] : memref<1x1x8x1xf32, #tpu.memory_space<vmem>>, vector<1x1x8x1xf32>
    %13 = vector.shape_cast %12 : vector<1x1x8x1xf32> to vector<8x1xf32>
    %14 = vector.shape_cast %11 : vector<8x1xf32> to vector<1x1x8x1xf32>
    tpu.vector_store %arg5[%c0_10, %c0_11, %c0_12, %c0_13], %14 {strides = array<i32>} : memref<1x1x8x1xf32, #tpu.memory_space<vmem>>, vector<1x1x8x1xf32>,
    %c0_14 = arith.constant 0 : index
    %c0_15 = arith.constant 0 : index
    %c0_16 = arith.constant 0 : index
    %c0_17 = arith.constant 0 : index
    %15 = vector.load %arg6[%c0_14, %c0_15, %c0_16, %c0_17] : memref<1x1x8x1xf32, #tpu.memory_space<vmem>>, vector<1x1x8x1xf32>
    %16 = vector.shape_cast %15 : vector<1x1x8x1xf32> to vector<8x1xf32>
    %17 = arith.mulf %6, %6 : vector<8x256xf32>
    %cst_18 = arith.constant dense<0.000000e+00> : vector<8xf32>
    %18 = vector.multi_reduction <add>, %17, %cst_18 [1] : vector<8x256xf32> to vector<8xf32>
    %19 = vector.shape_cast %18 : vector<8xf32> to vector<8x1xf32>
    %20 = arith.addf %16, %19 : vector<8x1xf32>
    %c0_19 = arith.constant 0 : index
    %c0_20 = arith.constant 0 : index
    %c0_21 = arith.constant 0 : index
    %c0_22 = arith.constant 0 : index
    %21 = vector.load %arg6[%c0_19, %c0_20, %c0_21, %c0_22] : memref<1x1x8x1xf32, #tpu.memory_space<vmem>>, vector<1x1x8x1xf32>
    %22 = vector.shape_cast %21 : vector<1x1x8x1xf32> to vector<8x1xf32>
    %23 = vector.shape_cast %20 : vector<8x1xf32> to vector<1x1x8x1xf32>
    tpu.vector_store %arg6[%c0_19, %c0_20, %c0_21, %c0_22], %23 {strides = array<i32>} : memref<1x1x8x1xf32, #tpu.memory_space<vmem>>, vector<1x1x8x1xf32>,
    return
  }
  func.func @transform_0(%arg0: i32, %arg1: i32, %arg2: i32) -> (i32, i32, i32) {
    %c1_i32 = arith.constant 1 : i32
    %0 = arith.muli %arg1, %c1_i32 : i32
    %1 = arith.addi %0, %arg2 : i32
    %c0_i32 = arith.constant 0 : i32
    %c0_i32_0 = arith.constant 0 : i32
    return %arg0, %c0_i32, %1 : i32, i32, i32
  }
  func.func @transform_1(%arg0: i32, %arg1: i32, %arg2: i32) -> (i32, i32) {
    %c0_i32 = arith.constant 0 : i32
    %c0_i32_0 = arith.constant 0 : i32
    %c0_i32_1 = arith.constant 0 : i32
    return %c0_i32, %c0_i32_0 : i32, i32
  }
  func.func @transform_2(%arg0: i32, %arg1: i32, %arg2: i32) -> (i32, i32, i32, i32) {
    %c0_i32 = arith.constant 0 : i32
    %c0_i32_0 = arith.constant 0 : i32
    %c0_i32_1 = arith.constant 0 : i32
    return %arg0, %arg1, %c0_i32, %c0_i32_0 : i32, i32, i32, i32
  }
  func.func @transform_3(%arg0: i32, %arg1: i32, %arg2: i32) -> (i32, i32, i32, i32) {
    %c0_i32 = arith.constant 0 : i32
    %c0_i32_0 = arith.constant 0 : i32
    %c0_i32_1 = arith.constant 0 : i32
    return %arg0, %arg1, %c0_i32, %c0_i32_0 : i32, i32, i32, i32
  }
}

module attributes {stable_mosaic.version = 11 : i64} {
  func.func @_conv_bn_act_kernel(%arg0: i32, %arg1: i32, %arg2: memref<1x4x256xf32, #tpu.memory_space<vmem>>, %arg3: memref<8x4xf32, #tpu.memory_space<vmem>>, %arg4: memref<8x1xf32, #tpu.memory_space<vmem>>, %arg5: memref<1x8x256xf32, #tpu.memory_space<vmem>>) attributes {dimension_semantics = [#tpu.dimension_semantics<parallel>, #tpu.dimension_semantics<parallel>], iteration_bounds = array<i64: 2, 1>, scalar_prefetch = 0 : i64, scratch_operands = 0 : i64, tpu.core_type = #tpu.core_type<tc>, window_params = [{transform_indices = @transform_0, window_bounds = array<i64: 1, 4, 256>}, {pipeline_mode = #tpu.pipeline_mode<synchronous>, transform_indices = @transform_1, window_bounds = array<i64: 8, 4>}, {pipeline_mode = #tpu.pipeline_mode<synchronous>, transform_indices = @transform_2, window_bounds = array<i64: 8, 1>}, {transform_indices = @transform_3, window_bounds = array<i64: 1, 8, 256>}]} {
    %c0 = arith.constant 0 : index
    %c0_0 = arith.constant 0 : index
    %0 = vector.load %arg3[%c0, %c0_0] : memref<8x4xf32, #tpu.memory_space<vmem>>, vector<8x4xf32>
    %c0_1 = arith.constant 0 : index
    %c0_2 = arith.constant 0 : index
    %c0_3 = arith.constant 0 : index
    %1 = vector.load %arg2[%c0_1, %c0_2, %c0_3] : memref<1x4x256xf32, #tpu.memory_space<vmem>>, vector<1x4x256xf32>
    %2 = vector.shape_cast %1 : vector<1x4x256xf32> to vector<4x256xf32>
    %cst = arith.constant dense<0.000000e+00> : vector<8x256xf32>
    %3 = tpu.matmul %0, %2, %cst {dimension_numbers = #tpu.dot_dimension_numbers<[1], [0], [0], [1], [0, 0, 1, 1], [], []>} : vector<8x4xf32>, vector<4x256xf32>, vector<8x256xf32> -> vector<8x256xf32>
    %c0_4 = arith.constant 0 : index
    %c0_5 = arith.constant 0 : index
    %4 = vector.load %arg4[%c0_4, %c0_5] : memref<8x1xf32, #tpu.memory_space<vmem>>, vector<8x1xf32>
    %5 = vector.broadcast %4 : vector<8x1xf32> to vector<8x256xf32>
    %6 = arith.addf %3, %5 : vector<8x256xf32>
    %cst_6 = arith.constant 0.000000e+00 : f32
    %7 = vector.broadcast %cst_6 : f32 to vector<8x256xf32>
    %8 = arith.cmpf oge, %6, %7 : vector<8x256xf32>
    %cst_7 = arith.constant 0.00999999977 : f32
    %9 = vector.broadcast %cst_7 : f32 to vector<8x256xf32>
    %10 = arith.mulf %9, %6 : vector<8x256xf32>
    %11 = arith.select %8, %6, %10 : vector<8x256xi1>, vector<8x256xf32>
    %c0_8 = arith.constant 0 : index
    %c0_9 = arith.constant 0 : index
    %c0_10 = arith.constant 0 : index
    %12 = vector.load %arg5[%c0_8, %c0_9, %c0_10] : memref<1x8x256xf32, #tpu.memory_space<vmem>>, vector<1x8x256xf32>
    %13 = vector.shape_cast %12 : vector<1x8x256xf32> to vector<8x256xf32>
    %14 = vector.shape_cast %11 : vector<8x256xf32> to vector<1x8x256xf32>
    tpu.vector_store %arg5[%c0_8, %c0_9, %c0_10], %14 {strides = array<i32>} : memref<1x8x256xf32, #tpu.memory_space<vmem>>, vector<1x8x256xf32>,
    return
  }
  func.func @transform_0(%arg0: i32, %arg1: i32) -> (i32, i32, i32) {
    %c0_i32 = arith.constant 0 : i32
    %c0_i32_0 = arith.constant 0 : i32
    return %arg0, %c0_i32, %arg1 : i32, i32, i32
  }
  func.func @transform_1(%arg0: i32, %arg1: i32) -> (i32, i32) {
    %c0_i32 = arith.constant 0 : i32
    %c0_i32_0 = arith.constant 0 : i32
    %c0_i32_1 = arith.constant 0 : i32
    return %c0_i32, %c0_i32_0 : i32, i32
  }
  func.func @transform_2(%arg0: i32, %arg1: i32) -> (i32, i32) {
    %c0_i32 = arith.constant 0 : i32
    %c0_i32_0 = arith.constant 0 : i32
    %c0_i32_1 = arith.constant 0 : i32
    return %c0_i32, %c0_i32_0 : i32, i32
  }
  func.func @transform_3(%arg0: i32, %arg1: i32) -> (i32, i32, i32) {
    %c0_i32 = arith.constant 0 : i32
    %c0_i32_0 = arith.constant 0 : i32
    return %arg0, %c0_i32, %arg1 : i32, i32, i32
  }
}

</mosaic_0001>

<llo_original>
// kernel: output_block_forward.2
$region0: #{output_block_forward.2}
  #allocation0 [shape = 'u32[]', space=smem, size = 0x4, offset = 0x4, fixed_abs, tag = 'smem constant byte address 0x4 - core index']
  #allocation1 [shape = 'u32[144,128]{1,0:T(1,128)}', space=vmem, size = 0x12000, scoped, tag = 'internal scratch']
  %s0 = inlined_call_operand.vmem [shape: f32[2,4,256], index: 0, kind: input, shape index: {}]
  %s1 = inlined_call_operand.vmem [shape: f32[8,4], index: 1, kind: input, shape index: {}]
  %s2 = inlined_call_operand.vmem [shape: f32[2,1,8,1], index: 2, kind: output, shape index: {0}]
  %s3 = inlined_call_operand.vmem [shape: f32[2,1,8,1], index: 3, kind: output, shape index: {1}]
  %4 = xla_tuple %s2, %s3
  %s5 = sld [smem:[#allocation0]]
  $region53: #{output_block_forward.2} parent=0
    _
  %s7 = ssub.s32 1, %s5
  %s8 = scalar_select 0, %s7, %s5
  loop: start=0, step=1, limit=4
  $region2: #{output_block_forward.2} parent=0 // loop_pre_header
    _
  $region3: #{output_block_forward.2} parent=0 // loop_header
    %s10 = sphi 0, %s14
    %p11 = scmp.ge.s32.totalorder %s10, 4
    %s17 = sphi 0, %s36
    %s18 = sphi 0, %s32
    %s19 = sphi 0, %s28
    %s20 = sphi 0, %s17
    %s21 = sphi 0, %s18
    %s22 = sphi 0, %s19
    %s23 = sphi 0, %s20
    %s24 = sphi 0, %s21
    %s25 = sphi 0, %s22
    %s43 = sphi 0, %s45
    %s46 = sphi 0, %s43
    %s47 = sphi 0, %s46
    %s63 = sphi 0, %s47
    %s67 = sphi 0, %s67
    %s69 = sphi 0, %s67
    %s70 = sphi 0, %s69
    %s84 = sphi 0, %s70
    %s92 = sphi 0, %s94
    %s95 = sphi 0, %s92
    %s96 = sphi 0, %s95
    %s112 = sphi 0, %s96
    %s120 = sphi 0, %s122
    %s123 = sphi 0, %s120
    %s124 = sphi 0, %s123
    %s140 = sphi 0, %s124
  $region4: #{output_block_forward.2} parent=0 // loop_header_branch
    %13 = sbr.rel (%p11) target = $region8
  $region5: #{output_block_forward.2} parent=0 // loop_body
    %s15 = ssub.s32 %s10, 1
    %s16 = ssub.s32 %s10, 2
    %s26 = sadd.s32 1, %s19
    %p27 = scmp.ge.s32.totalorder %s26, 1
    %s28 = scalar_select %p27, 0, %s26
    %s29 = sadd.s32 1, %s18
    %s30 = scalar_select %p27, %s29, %s18
    %p31 = scmp.ge.s32.totalorder %s30, 1
    %s32 = scalar_select %p31, 0, %s30
    %s33 = sadd.s32 1, %s17
    %s34 = scalar_select %p31, %s33, %s17
    %p35 = scmp.ge.s32.totalorder %s34, 2
    %s36 = scalar_select %p35, 0, %s34
    %s37 = sadd.s32 %s18, %s19
    %s38 = sadd.s32 %s32, %s28
    %s39 = ssub.s32 %s17, %s36
    %s40 = ssub.s32 %s37, %s38
    %s41 = sor.u32 %s39, %s40
    %p42 = scmp.eq.s32.totalorder %s41, 0
    %s44 = sadd.s32 %s43, 1
    %s45 = scalar_select %p42, %s43, %s44
    %p48 = pneg %p42
    %p49 = scmp.eq.s32.totalorder %s10, 1
    %p50 = por %p48, %p49
    %p51 = scmp.ne.s32.totalorder %s43, %s46
    %p52 = scmp.eq.s32.totalorder %s10, 0
    %p53 = por %p51, %p52
    %p54 = scmp.ne.s32.totalorder %s43, %s46
    %p55 = scmp.eq.s32.totalorder %s15, 1
    %p56 = por %p54, %p55
    %p57 = scmp.ne.s32.totalorder %s46, %s47
    %p58 = scmp.eq.s32.totalorder %s15, 0
    %p59 = por %p57, %p58
    %p60 = scmp.ne.s32.totalorder %s46, %s47
    %p61 = scmp.eq.s32.totalorder %s16, 1
    %p62 = por %p60, %p61
    %p64 = scmp.ne.s32.totalorder %s47, %s63
    %p65 = scmp.eq.s32.totalorder %s16, 0
    %p66 = por %p64, %p65
    %s68 = sadd.s32 %s67, 1
    %p71 = scmp.eq.s32.totalorder %s10, 1
    %p72 = scmp.ne.s32.totalorder %s67, %s69
    %p73 = scmp.eq.s32.totalorder %s10, 0
    %p74 = por %p72, %p73
    %p75 = scmp.ne.s32.totalorder %s67, %s69
    %p76 = scmp.eq.s32.totalorder %s15, 1
    %p77 = por %p75, %p76
    %p78 = scmp.ne.s32.totalorder %s69, %s70
    %p79 = scmp.eq.s32.totalorder %s15, 0
    %p80 = por %p78, %p79
    %p81 = scmp.ne.s32.totalorder %s69, %s70
    %p82 = scmp.eq.s32.totalorder %s16, 1
    %p83 = por %p81, %p82
    %p85 = scmp.ne.s32.totalorder %s70, %s84
    %p86 = scmp.eq.s32.totalorder %s16, 0
    %p87 = por %p85, %p86
    %s88 = ssub.s32 %s17, %s36
    %s89 = ssub.s32 %s18, %s32
    %s90 = sor.u32 %s88, %s89
    %p91 = scmp.eq.s32.totalorder %s90, 0
    %s93 = sadd.s32 %s92, 1
    %s94 = scalar_select %p91, %s92, %s93
    %p97 = pneg %p91
    %p98 = scmp.eq.s32.totalorder %s10, 1
    %p99 = por %p97, %p98
    %p100 = scmp.ne.s32.totalorder %s92, %s95
    %p101 = scmp.eq.s32.totalorder %s10, 0
    %p102 = por %p100, %p101
    %p103 = scmp.ne.s32.totalorder %s92, %s95
    %p104 = scmp.eq.s32.totalorder %s15, 1
    %p105 = por %p103, %p104
    %p106 = scmp.ne.s32.totalorder %s95, %s96
    %p107 = scmp.eq.s32.totalorder %s15, 0
    %p108 = por %p106, %p107
    %p109 = scmp.ne.s32.totalorder %s95, %s96
    %p110 = scmp.eq.s32.totalorder %s16, 1
    %p111 = por %p109, %p110
    %p113 = scmp.ne.s32.totalorder %s96, %s112
    %p114 = scmp.eq.s32.totalorder %s16, 0
    %p115 = por %p113, %p114
    %s116 = ssub.s32 %s17, %s36
    %s117 = ssub.s32 %s18, %s32
    %s118 = sor.u32 %s116, %s117
    %p119 = scmp.eq.s32.totalorder %s118, 0
    %s121 = sadd.s32 %s120, 1
    %s122 = scalar_select %p119, %s120, %s121
    %p125 = pneg %p119
    %p126 = scmp.eq.s32.totalorder %s10, 1
    %p127 = por %p125, %p126
    %p128 = scmp.ne.s32.totalorder %s120, %s123
    %p129 = scmp.eq.s32.totalorder %s10, 0
    %p130 = por %p128, %p129
    %p131 = scmp.ne.s32.totalorder %s120, %s123
    %p132 = scmp.eq.s32.totalorder %s15, 1
    %p133 = por %p131, %p132
    %p134 = scmp.ne.s32.totalorder %s123, %s124
    %p135 = scmp.eq.s32.totalorder %s15, 0
    %p136 = por %p134, %p135
    %p137 = scmp.ne.s32.totalorder %s123, %s124
    %p138 = scmp.eq.s32.totalorder %s16, 1
    %p139 = por %p137, %p138
    %p141 = scmp.ne.s32.totalorder %s124, %s140
    %p142 = scmp.eq.s32.totalorder %s16, 0
    %p143 = por %p141, %p142
    %p144 = scmp.le.s32.totalorder 1, %s10
    %p145 = scmp.lt.s32.totalorder %s10, 3
    %p146 = pnand %p144, %p145
    %p147 = pneg %p146
    // Predicated region
    $region9: #{output_block_forward.2} parent=5 // pred_check
      _
    $region10: #{output_block_forward.2} parent=5 // pred_check_branch
      %149 = sbr.rel (%p146) target = $region12
    $region11: #{output_block_forward.2} parent=5 // pred_region
      %s150 = ssub.s32 %s10, 1
      // Predicated region
      $region13: #{output_block_forward.2} parent=11 // pred_check
        %p151 = pneg %p80
      $region14: #{output_block_forward.2} parent=11 // pred_check_branch
        %153 = sbr.rel (%p151) target = $region16
      $region15: #{output_block_forward.2} parent=11 // pred_region
        _
      $region16: #{output_block_forward.2} parent=11 // pred_fallthru
        _
    $region12: #{output_block_forward.2} parent=5 // pred_fallthru
      _
    %p154 = scmp.lt.s32.totalorder %s10, 2
    // Predicated region
    $region17: #{output_block_forward.2} parent=5 // pred_check
      %p155 = pneg %p154
    $region18: #{output_block_forward.2} parent=5 // pred_check_branch
      %157 = sbr.rel (%p155) target = $region20
    $region19: #{output_block_forward.2} parent=5 // pred_region
      // Predicated region
      $region21: #{output_block_forward.2} parent=19 // pred_check
        %p158 = pneg %p53
      $region22: #{output_block_forward.2} parent=19 // pred_check_branch
        %160 = sbr.rel (%p158) target = $region24
      $region23: #{output_block_forward.2} parent=19 // pred_region
        %s161 = sadd.s32 %s18, %s19
        %s162 = smul.u32 2, %s161
        %p163 = scmp.lt.s32.totalorder %s17, 1
        %s164 = scalar_select %p163, %s17, 1
        %p165 = scmp.lt.s32.totalorder %s162, 1
        %s166 = scalar_select %p165, %s162, 1
        %s167 = smul.addr %s164, 2
        %s168 = sadd.s32 %s166, %s167
        %s169 = smul.addr %s168, 4
        %s170 = scalar_lea.vmem %s0, %s169
        %s171 = sadd.s32 %s18, %s19
        %s172 = smul.u32 2, %s171
      $region24: #{output_block_forward.2} parent=19 // pred_fallthru
        _
    $region20: #{output_block_forward.2} parent=5 // pred_fallthru
      _
    %p173 = scmp.le.s32.totalorder 1, %s10
    %p174 = scmp.lt.s32.totalorder %s10, 3
    %p175 = pnand %p173, %p174
    %p176 = pneg %p175
    // Predicated region
    $region25: #{output_block_forward.2} parent=5 // pred_check
      _
    $region26: #{output_block_forward.2} parent=5 // pred_check_branch
      %178 = sbr.rel (%p175) target = $region28
    $region27: #{output_block_forward.2} parent=5 // pred_region
      %s179 = ssub.s32 %s10, 1
      %s180 = sadd.s32 %s21, %s22
      %s181 = smul.u32 2, %s180
      %p182 = scmp.lt.s32.totalorder %s20, 1
      %s183 = scalar_select %p182, %s20, 1
      %p184 = scmp.lt.s32.totalorder %s181, 1
      %s185 = scalar_select %p184, %s181, 1
      %s186 = smul.addr %s183, 2
      %s187 = sadd.s32 %s185, %s186
      %s188 = smul.addr %s187, 4
      %s189 = scalar_lea.vmem %s0, %s188
      %p190 = pneg %p59
      %p191 = pneg %p56
      %p192 = pneg %p80
      %p193 = pneg %p77
      %p194 = pneg %p108
      %p195 = pneg %p105
      %p196 = scmp.lt.s32.totalorder %s20, 1
      %s197 = scalar_select %p196, %s20, 1
      %p198 = scmp.lt.s32.totalorder %s21, 0
      %s199 = scalar_select %p198, %s21, 0
      %s200 = sadd.s32 %s199, %s197
      %s201 = smul.addr %s200, 8
      %s202 = scalar_lea.vmem %s2, %s201
      %p203 = pneg %p136
      %p204 = pneg %p133
      %p205 = scmp.lt.s32.totalorder %s20, 1
      %s206 = scalar_select %p205, %s20, 1
      %p207 = scmp.lt.s32.totalorder %s21, 0
      %s208 = scalar_select %p207, %s21, 0
      %s209 = sadd.s32 %s208, %s206
      %s210 = smul.addr %s209, 8
      %s211 = scalar_lea.vmem %s3, %s210
      %s212 = sadd.s32 %s21, %s22
      %s213 = smul.u32 2, %s212
      %p214 = scmp.lt.s32.totalorder %s20, 1
      %s215 = scalar_select %p214, %s20, 1
      %p216 = scmp.lt.s32.totalorder %s213, 1
      %s217 = scalar_select %p216, %s213, 1
      %s218 = smul.addr %s215, 2
      %s219 = sadd.s32 %s217, %s218
      %s220 = smul.addr %s219, 4
      %s221 = scalar_lea.vmem %s0, %s220
      %s222 = sadd.s32 %s21, %s22
      %s223 = smul.u32 2, %s222
      %p224 = scmp.lt.s32.totalorder %s20, 1
      %s225 = scalar_select %p224, %s20, 1
      %p226 = scmp.lt.s32.totalorder %s21, 0
      %s227 = scalar_select %p226, %s21, 0
      %s228 = sadd.s32 %s227, %s225
      %s229 = smul.addr %s228, 8
      %s230 = scalar_lea.vmem %s2, %s229
      %p231 = scmp.lt.s32.totalorder %s20, 1
      %s232 = scalar_select %p231, %s20, 1
      %p233 = scmp.lt.s32.totalorder %s21, 0
      %s234 = scalar_select %p233, %s21, 0
      %s235 = sadd.s32 %s234, %s232
      %s236 = smul.addr %s235, 8
      %s237 = scalar_lea.vmem %s3, %s236
      %p238 = scmp.eq.s32.totalorder %s22, 0
      // Predicated region
      $region29: #{output_block_forward.2} parent=27 // pred_check
        %p239 = pneg %p238
      $region30: #{output_block_forward.2} parent=27 // pred_check_branch
        %241 = sbr.rel (%p239) target = $region32
      $region31: #{output_block_forward.2} parent=27 // pred_region
        %vm242 = vcmask 7168
        %243 = vst.msk [vmem:[%s230] sm:$0xff] %vm242, 0.0
        %244 = vst.msk [vmem:[%s237] sm:$0xff] %vm242, 0.0
      $region32: #{output_block_forward.2} parent=27 // pred_fallthru
        _
      %v245 = vld [vmem:[%s221] sm:$0xff]
      %v246 = vld [vmem:[%s1] sm:$0xff]
      %v248 = vcombine.high %v245, %v245
      %vm249 = vcmask 31744
      %v251 = vsel %vm249, %v246, 0
      %vm253 = vcmask 1043456
      %v254 = vsel %vm253, %v245, 0
      %v256 = vsel %vm253, %v248, 0
      %258 = vmatprep.subr.mxu0 %v256
      %259 = vmatpush1.msra.mxu0 %v254
      %260 = vmatprep.subr.mxu0 0.0
      %261 = vmatpush1.msra.mxu0 0.0
      %262 = vmatprep.subr.mxu0 0.0
      %263 = vmatpush1.msra.mxu0 0.0
      %264 = vmatprep.subr.mxu0 0.0
      %265 = vmatpush1.msra.mxu0 0.0
      %266 = vmatprep.subr.mxu0 0.0
      %267 = vmatpush1.msra.mxu0 0.0
      %268 = vmatprep.subr.mxu0 0.0
      %269 = vmatpush1.msra.mxu0 0.0
      %270 = vmatprep.subr.mxu0 0.0
      %271 = vmatpush1.msra.mxu0 0.0
      %272 = vmatprep.subr.mxu0 0.0
      %273 = vmatpush1.msra.mxu0 0.0
      %274 = vmatprep.subr.mxu0 0.0
      %275 = vmatpush1.msra.mxu0 0.0
      %276 = vmatprep.subr.mxu0 0.0
      %277 = vmatpush1.msra.mxu0 0.0
      %278 = vmatprep.subr.mxu0 0.0
      %279 = vmatpush1.msra.mxu0 0.0
      %280 = vmatprep.subr.mxu0 0.0
      %281 = vmatpush1.msra.mxu0 0.0
      %282 = vmatprep.subr.mxu0 0.0
      %283 = vmatpush1.msra.mxu0 0.0
      %284 = vmatprep.subr.mxu0 0.0
      %285 = vmatpush1.msra.mxu0 0.0
      %286 = vmatprep.subr.mxu0 0.0
      %287 = vmatpush1.msra.mxu0 0.0
      %288 = vmatprep.subr.mxu0 0.0
      %289 = vmatpush1.msra.mxu0 0.0
      %290 = vmatprep.subr.mxu0 0.0
      %291 = vmatpush1.msra.mxu0 0.0
      %292 = vmatprep.subr.mxu0 0.0
      %293 = vmatpush1.msra.mxu0 0.0
      %294 = vmatprep.subr.mxu0 0.0
      %295 = vmatpush1.msra.mxu0 0.0
      %296 = vmatprep.subr.mxu0 0.0
      %297 = vmatpush1.msra.mxu0 0.0
      %298 = vmatprep.subr.mxu0 0.0
      %299 = vmatpush1.msra.mxu0 0.0
      %300 = vmatprep.subr.mxu0 0.0
      %301 = vmatpush1.msra.mxu0 0.0
      %302 = vmatprep.subr.mxu0 0.0
      %303 = vmatpush1.msra.mxu0 0.0
      %304 = vmatprep.subr.mxu0 0.0
      %305 = vmatpush1.msra.mxu0 0.0
      %306 = vmatprep.subr.mxu0 0.0
      %307 = vmatpush1.msra.mxu0 0.0
      %308 = vmatprep.subr.mxu0 0.0
      %309 = vmatpush1.msra.mxu0 0.0
      %310 = vmatprep.subr.mxu0 0.0
      %311 = vmatpush1.msra.mxu0 0.0
      %312 = vmatprep.subr.mxu0 0.0
      %313 = vmatpush1.msra.mxu0 0.0
      %314 = vmatprep.subr.mxu0 0.0
      %315 = vmatpush1.msra.mxu0 0.0
      %316 = vmatprep.subr.mxu0 0.0
      %317 = vmatpush1.msra.mxu0 0.0
      %318 = vmatprep.subr.mxu0 0.0
      %319 = vmatpush1.msra.mxu0 0.0
      %320 = vmatprep.subr.mxu0 0.0
      %321 = vmatpush1.msra.mxu0 0.0
      %322 = vmatprep.mubr.f32.mxu0 0.0
      %323 = vmatmul.mubr.f32.gmra.mrb[0].mxu0 %v251
      %v324 = vpop.f32.mrb[0].mxu0
      %v325 = vadd.f32 0.0, %v324
      %v326 = vpop.f32.mrb[0].mxu0
      %v327 = vadd.f32 0.0, %v326
      %328 = vdwg.mxu0
      %v329 = vld [vmem:[%s230] sm:$0xff]
      %v330 = vadd.f32 %v325, %v327
      %331 = vadd.xlane.f32.xlu0 %v330
      %v332 = vpop.xlane.xlu0 %331
      %v333 = vadd.f32 %v329, %v332
      %vm334 = vcmask 7168
      %335 = vst.msk [vmem:[%s230] sm:$0xff] %vm334, %v333
      %v336 = vld [vmem:[%s237] sm:$0xff]
      %v337 = vmul.f32 %v325, %v325
      %v338 = vmul.f32 %v327, %v327
      %v339 = vadd.f32 %v337, %v338
      %340 = vadd.xlane.f32.xlu0 %v339
      %v341 = vpop.xlane.xlu0 %340
      %v342 = vadd.f32 %v336, %v341
      %343 = vst.msk [vmem:[%s237] sm:$0xff] %vm334, %v342
      %p344 = scmp.lt.s32.totalorder %s20, 1
      %s345 = scalar_select %p344, %s20, 1
      %p346 = scmp.lt.s32.totalorder %s21, 0
      %s347 = scalar_select %p346, %s21, 0
      %s348 = sadd.s32 %s347, %s345
      %s349 = smul.addr %s348, 8
      %s350 = scalar_lea.vmem %s2, %s349
      %p351 = scmp.lt.s32.totalorder %s20, 1
      %s352 = scalar_select %p351, %s20, 1
      %p353 = scmp.lt.s32.totalorder %s21, 0
      %s354 = scalar_select %p353, %s21, 0
      %s355 = sadd.s32 %s354, %s352
      %s356 = smul.addr %s355, 8
      %s357 = scalar_lea.vmem %s3, %s356
      // Predicated region
      $region33: #{output_block_forward.2} parent=27 // pred_check
        %p358 = pneg %p105
      $region34: #{output_block_forward.2} parent=27 // pred_check_branch
        %360 = sbr.rel (%p358) target = $region36
      $region35: #{output_block_forward.2} parent=27 // pred_region
        _
      $region36: #{output_block_forward.2} parent=27 // pred_fallthru
        _
      // Predicated region
      $region37: #{output_block_forward.2} parent=27 // pred_check
        %p361 = pneg %p133
      $region38: #{output_block_forward.2} parent=27 // pred_check_branch
        %363 = sbr.rel (%p361) target = $region40
      $region39: #{output_block_forward.2} parent=27 // pred_region
        _
      $region40: #{output_block_forward.2} parent=27 // pred_fallthru
        _
    $region28: #{output_block_forward.2} parent=5 // pred_fallthru
      _
    %p364 = scmp.le.s32.totalorder 2, %s10
    // Predicated region
    $region41: #{output_block_forward.2} parent=5 // pred_check
      %p365 = pneg %p364
    $region42: #{output_block_forward.2} parent=5 // pred_check_branch
      %367 = sbr.rel (%p365) target = $region44
    $region43: #{output_block_forward.2} parent=5 // pred_region
      %s368 = ssub.s32 %s10, 2
      // Predicated region
      $region45: #{output_block_forward.2} parent=43 // pred_check
        %p369 = pneg %p111
      $region46: #{output_block_forward.2} parent=43 // pred_check_branch
        %371 = sbr.rel (%p369) target = $region48
      $region47: #{output_block_forward.2} parent=43 // pred_region
        %p372 = scmp.lt.s32.totalorder %s23, 1
        %s373 = scalar_select %p372, %s23, 1
        %p374 = scmp.lt.s32.totalorder %s24, 0
        %s375 = scalar_select %p374, %s24, 0
        %s376 = sadd.s32 %s375, %s373
        %s377 = smul.addr %s376, 8
        %s378 = scalar_lea.vmem %s2, %s377
      $region48: #{output_block_forward.2} parent=43 // pred_fallthru
        _
      // Predicated region
      $region49: #{output_block_forward.2} parent=43 // pred_check
        %p379 = pneg %p139
      $region50: #{output_block_forward.2} parent=43 // pred_check_branch
        %381 = sbr.rel (%p379) target = $region52
      $region51: #{output_block_forward.2} parent=43 // pred_region
        %p382 = scmp.lt.s32.totalorder %s23, 1
        %s383 = scalar_select %p382, %s23, 1
        %p384 = scmp.lt.s32.totalorder %s24, 0
        %s385 = scalar_select %p384, %s24, 0
        %s386 = sadd.s32 %s385, %s383
        %s387 = smul.addr %s386, 8
        %s388 = scalar_lea.vmem %s3, %s387
      $region52: #{output_block_forward.2} parent=43 // pred_fallthru
        _
    $region44: #{output_block_forward.2} parent=5 // pred_fallthru
      _
  $region6: #{output_block_forward.2} parent=0 // loop_footer
    %s14 = sadd.s32 1, %s10
  $region7: #{output_block_forward.2} parent=0 // loop_footer_branch
    %9 = sbr.rel target = $region3
  $region8: #{output_block_forward.2} parent=0 // loop_exit
    _

// kernel: output_block_forward.3
$region0: #{output_block_forward.3}
  #allocation0 [shape = 'u32[]', space=smem, size = 0x4, offset = 0x4, fixed_abs, tag = 'smem constant byte address 0x4 - core index']
  #allocation1 [shape = 'u32[144,128]{1,0:T(1,128)}', space=vmem, size = 0x12000, scoped, tag = 'internal scratch']
  %s0 = inlined_call_operand.vmem [shape: f32[2,4,256], index: 0, kind: input, shape index: {}]
  %s1 = inlined_call_operand.vmem [shape: f32[8,4], index: 1, kind: input, shape index: {}]
  %s2 = inlined_call_operand.vmem [shape: f32[8,1], index: 2, kind: input, shape index: {}]
  %s3 = inlined_call_operand.vmem [shape: f32[2,8,256], index: 3, kind: output, shape index: {}]
  %s4 = sld [smem:[#allocation0]]
  $region45: #{output_block_forward.3} parent=0
    _
  %s6 = ssub.s32 1, %s4
  %s7 = scalar_select 0, %s6, %s4
  loop: start=0, step=1, limit=4
  $region2: #{output_block_forward.3} parent=0 // loop_pre_header
    _
  $region3: #{output_block_forward.3} parent=0 // loop_header
    %s9 = sphi 0, %s13
    %p10 = scmp.ge.s32.totalorder %s9, 4
    %s16 = sphi 0, %s28
    %s17 = sphi 0, %s24
    %s18 = sphi 0, %s16
    %s19 = sphi 0, %s17
    %s20 = sphi 0, %s18
    %s21 = sphi 0, %s19
    %s33 = sphi 0, %s35
    %s36 = sphi 0, %s33
    %s37 = sphi 0, %s36
    %s53 = sphi 0, %s37
    %s57 = sphi 0, %s57
    %s59 = sphi 0, %s57
    %s60 = sphi 0, %s59
    %s74 = sphi 0, %s60
    %s78 = sphi 0, %s78
    %s80 = sphi 0, %s78
    %s81 = sphi 0, %s80
    %s95 = sphi 0, %s81
    %s103 = sphi 0, %s105
    %s106 = sphi 0, %s103
    %s107 = sphi 0, %s106
    %s123 = sphi 0, %s107
  $region4: #{output_block_forward.3} parent=0 // loop_header_branch
    %12 = sbr.rel (%p10) target = $region8
  $region5: #{output_block_forward.3} parent=0 // loop_body
    %s14 = ssub.s32 %s9, 1
    %s15 = ssub.s32 %s9, 2
    %s22 = sadd.s32 1, %s17
    %p23 = scmp.ge.s32.totalorder %s22, 1
    %s24 = scalar_select %p23, 0, %s22
    %s25 = sadd.s32 1, %s16
    %s26 = scalar_select %p23, %s25, %s16
    %p27 = scmp.ge.s32.totalorder %s26, 2
    %s28 = scalar_select %p27, 0, %s26
    %s29 = ssub.s32 %s16, %s28
    %s30 = ssub.s32 %s17, %s24
    %s31 = sor.u32 %s29, %s30
    %p32 = scmp.eq.s32.totalorder %s31, 0
    %s34 = sadd.s32 %s33, 1
    %s35 = scalar_select %p32, %s33, %s34
    %p38 = pneg %p32
    %p39 = scmp.eq.s32.totalorder %s9, 1
    %p40 = por %p38, %p39
    %p41 = scmp.ne.s32.totalorder %s33, %s36
    %p42 = scmp.eq.s32.totalorder %s9, 0
    %p43 = por %p41, %p42
    %p44 = scmp.ne.s32.totalorder %s33, %s36
    %p45 = scmp.eq.s32.totalorder %s14, 1
    %p46 = por %p44, %p45
    %p47 = scmp.ne.s32.totalorder %s36, %s37
    %p48 = scmp.eq.s32.totalorder %s14, 0
    %p49 = por %p47, %p48
    %p50 = scmp.ne.s32.totalorder %s36, %s37
    %p51 = scmp.eq.s32.totalorder %s15, 1
    %p52 = por %p50, %p51
    %p54 = scmp.ne.s32.totalorder %s37, %s53
    %p55 = scmp.eq.s32.totalorder %s15, 0
    %p56 = por %p54, %p55
    %s58 = sadd.s32 %s57, 1
    %p61 = scmp.eq.s32.totalorder %s9, 1
    %p62 = scmp.ne.s32.totalorder %s57, %s59
    %p63 = scmp.eq.s32.totalorder %s9, 0
    %p64 = por %p62, %p63
    %p65 = scmp.ne.s32.totalorder %s57, %s59
    %p66 = scmp.eq.s32.totalorder %s14, 1
    %p67 = por %p65, %p66
    %p68 = scmp.ne.s32.totalorder %s59, %s60
    %p69 = scmp.eq.s32.totalorder %s14, 0
    %p70 = por %p68, %p69
    %p71 = scmp.ne.s32.totalorder %s59, %s60
    %p72 = scmp.eq.s32.totalorder %s15, 1
    %p73 = por %p71, %p72
    %p75 = scmp.ne.s32.totalorder %s60, %s74
    %p76 = scmp.eq.s32.totalorder %s15, 0
    %p77 = por %p75, %p76
    %s79 = sadd.s32 %s78, 1
    %p82 = scmp.eq.s32.totalorder %s9, 1
    %p83 = scmp.ne.s32.totalorder %s78, %s80
    %p84 = scmp.eq.s32.totalorder %s9, 0
    %p85 = por %p83, %p84
    %p86 = scmp.ne.s32.totalorder %s78, %s80
    %p87 = scmp.eq.s32.totalorder %s14, 1
    %p88 = por %p86, %p87
    %p89 = scmp.ne.s32.totalorder %s80, %s81
    %p90 = scmp.eq.s32.totalorder %s14, 0
    %p91 = por %p89, %p90
    %p92 = scmp.ne.s32.totalorder %s80, %s81
    %p93 = scmp.eq.s32.totalorder %s15, 1
    %p94 = por %p92, %p93
    %p96 = scmp.ne.s32.totalorder %s81, %s95
    %p97 = scmp.eq.s32.totalorder %s15, 0
    %p98 = por %p96, %p97
    %s99 = ssub.s32 %s16, %s28
    %s100 = ssub.s32 %s17, %s24
    %s101 = sor.u32 %s99, %s100
    %p102 = scmp.eq.s32.totalorder %s101, 0
    %s104 = sadd.s32 %s103, 1
    %s105 = scalar_select %p102, %s103, %s104
    %p108 = pneg %p102
    %p109 = scmp.eq.s32.totalorder %s9, 1
    %p110 = por %p108, %p109
    %p111 = scmp.ne.s32.totalorder %s103, %s106
    %p112 = scmp.eq.s32.totalorder %s9, 0
    %p113 = por %p111, %p112
    %p114 = scmp.ne.s32.totalorder %s103, %s106
    %p115 = scmp.eq.s32.totalorder %s14, 1
    %p116 = por %p114, %p115
    %p117 = scmp.ne.s32.totalorder %s106, %s107
    %p118 = scmp.eq.s32.totalorder %s14, 0
    %p119 = por %p117, %p118
    %p120 = scmp.ne.s32.totalorder %s106, %s107
    %p121 = scmp.eq.s32.totalorder %s15, 1
    %p122 = por %p120, %p121
    %p124 = scmp.ne.s32.totalorder %s107, %s123
    %p125 = scmp.eq.s32.totalorder %s15, 0
    %p126 = por %p124, %p125
    %p127 = scmp.le.s32.totalorder 1, %s9
    %p128 = scmp.lt.s32.totalorder %s9, 3
    %p129 = pnand %p127, %p128
    %p130 = pneg %p129
    // Predicated region
    $region9: #{output_block_forward.3} parent=5 // pred_check
      _
    $region10: #{output_block_forward.3} parent=5 // pred_check_branch
      %132 = sbr.rel (%p129) target = $region12
    $region11: #{output_block_forward.3} parent=5 // pred_region
      %s133 = ssub.s32 %s9, 1
      // Predicated region
      $region13: #{output_block_forward.3} parent=11 // pred_check
        %p134 = pneg %p70
      $region14: #{output_block_forward.3} parent=11 // pred_check_branch
        %136 = sbr.rel (%p134) target = $region16
      $region15: #{output_block_forward.3} parent=11 // pred_region
        _
      $region16: #{output_block_forward.3} parent=11 // pred_fallthru
        _
      // Predicated region
      $region17: #{output_block_forward.3} parent=11 // pred_check
        %p137 = pneg %p91
      $region18: #{output_block_forward.3} parent=11 // pred_check_branch
        %139 = sbr.rel (%p137) target = $region20
      $region19: #{output_block_forward.3} parent=11 // pred_region
        _
      $region20: #{output_block_forward.3} parent=11 // pred_fallthru
        _
    $region12: #{output_block_forward.3} parent=5 // pred_fallthru
      _
    %p140 = scmp.lt.s32.totalorder %s9, 2
    // Predicated region
    $region21: #{output_block_forward.3} parent=5 // pred_check
      %p141 = pneg %p140
    $region22: #{output_block_forward.3} parent=5 // pred_check_branch
      %143 = sbr.rel (%p141) target = $region24
    $region23: #{output_block_forward.3} parent=5 // pred_region
      // Predicated region
      $region25: #{output_block_forward.3} parent=23 // pred_check
        %p144 = pneg %p43
      $region26: #{output_block_forward.3} parent=23 // pred_check_branch
        %146 = sbr.rel (%p144) target = $region28
      $region27: #{output_block_forward.3} parent=23 // pred_region
        %s147 = smul.u32 2, %s17
        %p148 = scmp.lt.s32.totalorder %s16, 1
        %s149 = scalar_select %p148, %s16, 1
        %p150 = scmp.lt.s32.totalorder %s147, 1
        %s151 = scalar_select %p150, %s147, 1
        %s152 = smul.addr %s149, 2
        %s153 = sadd.s32 %s151, %s152
        %s154 = smul.addr %s153, 4
        %s155 = scalar_lea.vmem %s0, %s154
        %s156 = smul.u32 2, %s17
      $region28: #{output_block_forward.3} parent=23 // pred_fallthru
        _
    $region24: #{output_block_forward.3} parent=5 // pred_fallthru
      _
    %p157 = scmp.le.s32.totalorder 1, %s9
    %p158 = scmp.lt.s32.totalorder %s9, 3
    %p159 = pnand %p157, %p158
    %p160 = pneg %p159
    // Predicated region
    $region29: #{output_block_forward.3} parent=5 // pred_check
      _
    $region30: #{output_block_forward.3} parent=5 // pred_check_branch
      %162 = sbr.rel (%p159) target = $region32
    $region31: #{output_block_forward.3} parent=5 // pred_region
      %s163 = ssub.s32 %s9, 1
      %s164 = smul.u32 2, %s19
      %p165 = scmp.lt.s32.totalorder %s18, 1
      %s166 = scalar_select %p165, %s18, 1
      %p167 = scmp.lt.s32.totalorder %s164, 1
      %s168 = scalar_select %p167, %s164, 1
      %s169 = smul.addr %s166, 2
      %s170 = sadd.s32 %s168, %s169
      %s171 = smul.addr %s170, 4
      %s172 = scalar_lea.vmem %s0, %s171
      %p173 = pneg %p49
      %p174 = pneg %p46
      %p175 = pneg %p70
      %p176 = pneg %p67
      %p177 = pneg %p91
      %p178 = pneg %p88
      %p179 = pneg %p119
      %p180 = pneg %p116
      %s181 = smul.u32 2, %s19
      %p182 = scmp.lt.s32.totalorder %s18, 1
      %s183 = scalar_select %p182, %s18, 1
      %p184 = scmp.lt.s32.totalorder %s181, 1
      %s185 = scalar_select %p184, %s181, 1
      %s186 = smul.addr %s183, 2
      %s187 = sadd.s32 %s185, %s186
      %s188 = smul.addr %s187, 8
      %s189 = scalar_lea.vmem %s3, %s188
      %s190 = smul.u32 2, %s19
      %p191 = scmp.lt.s32.totalorder %s18, 1
      %s192 = scalar_select %p191, %s18, 1
      %p193 = scmp.lt.s32.totalorder %s190, 1
      %s194 = scalar_select %p193, %s190, 1
      %s195 = smul.addr %s192, 2
      %s196 = sadd.s32 %s194, %s195
      %s197 = smul.addr %s196, 4
      %s198 = scalar_lea.vmem %s0, %s197
      %s199 = smul.u32 2, %s19
      %s200 = smul.u32 2, %s19
      %p201 = scmp.lt.s32.totalorder %s18, 1
      %s202 = scalar_select %p201, %s18, 1
      %p203 = scmp.lt.s32.totalorder %s200, 1
      %s204 = scalar_select %p203, %s200, 1
      %s205 = smul.addr %s202, 2
      %s206 = sadd.s32 %s204, %s205
      %s207 = smul.addr %s206, 8
      %s208 = scalar_lea.vmem %s3, %s207
      %s209 = smul.u32 2, %s19
      %v210 = vld [vmem:[%s1] sm:$0xff]
      %v211 = vld [vmem:[%s198] sm:$0xff]
      %v212 = vld [vmem:[%s2] sm:$0xff]
      %214 = vset.pattern.permute.xlu0 0
      %215 = vperm.xlu0 %214, %v212
      %v216 = vpop.permute.xlu0 %215
      %v219 = vcombine.high %v211, %v211
      %vm220 = vcmask 31744
      %v222 = vsel %vm220, %v210, 0
      %vm224 = vcmask 1043456
      %v225 = vsel %vm224, %v211, 0
      %v227 = vsel %vm224, %v219, 0
      %229 = vmatprep.subr.mxu0 %v227
      %230 = vmatpush1.msra.mxu0 %v225
      %231 = vmatprep.subr.mxu0 0.0
      %232 = vmatpush1.msra.mxu0 0.0
      %233 = vmatprep.subr.mxu0 0.0
      %234 = vmatpush1.msra.mxu0 0.0
      %235 = vmatprep.subr.mxu0 0.0
      %236 = vmatpush1.msra.mxu0 0.0
      %237 = vmatprep.subr.mxu0 0.0
      %238 = vmatpush1.msra.mxu0 0.0
      %239 = vmatprep.subr.mxu0 0.0
      %240 = vmatpush1.msra.mxu0 0.0
      %241 = vmatprep.subr.mxu0 0.0
      %242 = vmatpush1.msra.mxu0 0.0
      %243 = vmatprep.subr.mxu0 0.0
      %244 = vmatpush1.msra.mxu0 0.0
      %245 = vmatprep.subr.mxu0 0.0
      %246 = vmatpush1.msra.mxu0 0.0
      %247 = vmatprep.subr.mxu0 0.0
      %248 = vmatpush1.msra.mxu0 0.0
      %249 = vmatprep.subr.mxu0 0.0
      %250 = vmatpush1.msra.mxu0 0.0
      %251 = vmatprep.subr.mxu0 0.0
      %252 = vmatpush1.msra.mxu0 0.0
      %253 = vmatprep.subr.mxu0 0.0
      %254 = vmatpush1.msra.mxu0 0.0
      %255 = vmatprep.subr.mxu0 0.0
      %256 = vmatpush1.msra.mxu0 0.0
      %257 = vmatprep.subr.mxu0 0.0
      %258 = vmatpush1.msra.mxu0 0.0
      %259 = vmatprep.subr.mxu0 0.0
      %260 = vmatpush1.msra.mxu0 0.0
      %261 = vmatprep.subr.mxu0 0.0
      %262 = vmatpush1.msra.mxu0 0.0
      %263 = vmatprep.subr.mxu0 0.0
      %264 = vmatpush1.msra.mxu0 0.0
      %265 = vmatprep.subr.mxu0 0.0
      %266 = vmatpush1.msra.mxu0 0.0
      %267 = vmatprep.subr.mxu0 0.0
      %268 = vmatpush1.msra.mxu0 0.0
      %269 = vmatprep.subr.mxu0 0.0
      %270 = vmatpush1.msra.mxu0 0.0
      %271 = vmatprep.subr.mxu0 0.0
      %272 = vmatpush1.msra.mxu0 0.0
      %273 = vmatprep.subr.mxu0 0.0
      %274 = vmatpush1.msra.mxu0 0.0
      %275 = vmatprep.subr.mxu0 0.0
      %276 = vmatpush1.msra.mxu0 0.0
      %277 = vmatprep.subr.mxu0 0.0
      %278 = vmatpush1.msra.mxu0 0.0
      %279 = vmatprep.subr.mxu0 0.0
      %280 = vmatpush1.msra.mxu0 0.0
      %281 = vmatprep.subr.mxu0 0.0
      %282 = vmatpush1.msra.mxu0 0.0
      %283 = vmatprep.subr.mxu0 0.0
      %284 = vmatpush1.msra.mxu0 0.0
      %285 = vmatprep.subr.mxu0 0.0
      %286 = vmatpush1.msra.mxu0 0.0
      %287 = vmatprep.subr.mxu0 0.0
      %288 = vmatpush1.msra.mxu0 0.0
      %289 = vmatprep.subr.mxu0 0.0
      %290 = vmatpush1.msra.mxu0 0.0
      %291 = vmatprep.subr.mxu0 0.0
      %292 = vmatpush1.msra.mxu0 0.0
      %293 = vmatprep.mubr.f32.mxu0 0.0
      %294 = vmatmul.mubr.f32.gmra.mrb[0].mxu0 %v222
      %v295 = vpop.f32.mrb[0].mxu0
      %v296 = vadd.f32 %v216, %v295
      %v297 = vpop.f32.mrb[0].mxu0
      %v298 = vadd.f32 %v216, %v297
      %299 = vdwg.mxu0
      %vm300 = vcmp.ge.f32.partialorder %v296, 0.0
      %vm301 = vcmp.ge.f32.partialorder %v298, 0.0
      %v302 = vmul.f32 %v296, 0.01
      %v303 = vmul.f32 %v298, 0.01
      %v304 = vsel %vm300, %v296, %v302
      %v305 = vsel %vm301, %v298, %v303
      %306 = vst [vmem:[%s208] sm:$0xff] %v304
      %307 = vst [vmem:[%s208 + $0x8] sm:$0xff] %v305
      %s308 = smul.u32 2, %s19
      %p309 = scmp.lt.s32.totalorder %s18, 1
      %s310 = scalar_select %p309, %s18, 1
      %p311 = scmp.lt.s32.totalorder %s308, 1
      %s312 = scalar_select %p311, %s308, 1
      %s313 = smul.addr %s310, 2
      %s314 = sadd.s32 %s312, %s313
      %s315 = smul.addr %s314, 8
      %s316 = scalar_lea.vmem %s3, %s315
      // Predicated region
      $region33: #{output_block_forward.3} parent=31 // pred_check
        %p317 = pneg %p116
      $region34: #{output_block_forward.3} parent=31 // pred_check_branch
        %319 = sbr.rel (%p317) target = $region36
      $region35: #{output_block_forward.3} parent=31 // pred_region
        %s320 = smul.u32 2, %s19
      $region36: #{output_block_forward.3} parent=31 // pred_fallthru
        _
    $region32: #{output_block_forward.3} parent=5 // pred_fallthru
      _
    %p321 = scmp.le.s32.totalorder 2, %s9
    // Predicated region
    $region37: #{output_block_forward.3} parent=5 // pred_check
      %p322 = pneg %p321
    $region38: #{output_block_forward.3} parent=5 // pred_check_branch
      %324 = sbr.rel (%p322) target = $region40
    $region39: #{output_block_forward.3} parent=5 // pred_region
      %s325 = ssub.s32 %s9, 2
      // Predicated region
      $region41: #{output_block_forward.3} parent=39 // pred_check
        %p326 = pneg %p122
      $region42: #{output_block_forward.3} parent=39 // pred_check_branch
        %328 = sbr.rel (%p326) target = $region44
      $region43: #{output_block_forward.3} parent=39 // pred_region
        %s329 = smul.u32 2, %s21
        %p330 = scmp.lt.s32.totalorder %s20, 1
        %s331 = scalar_select %p330, %s20, 1
        %p332 = scmp.lt.s32.totalorder %s329, 1
        %s333 = scalar_select %p332, %s329, 1
        %s334 = smul.addr %s331, 2
        %s335 = sadd.s32 %s333, %s334
        %s336 = smul.addr %s335, 8
        %s337 = scalar_lea.vmem %s3, %s336
      $region44: #{output_block_forward.3} parent=39 // pred_fallthru
        _
    $region40: #{output_block_forward.3} parent=5 // pred_fallthru
      _
  $region6: #{output_block_forward.3} parent=0 // loop_footer
    %s13 = sadd.s32 1, %s9
  $region7: #{output_block_forward.3} parent=0 // loop_footer_branch
    %8 = sbr.rel target = $region3
  $region8: #{output_block_forward.3} parent=0 // loop_exit
    _

</llo_original>
